<compile_context>
chip_gen: v7x
topology: tpu7x:2x2x1
jax: 0.10.0
libtpu: 0.0.40
codegen_flags: <defaults>
</compile_context>

<pallas_src>
import functools
from typing import NamedTuple, Optional, Union

import jax
import jax.numpy as jnp
from jax.experimental import pallas as pl
from jax.experimental.pallas import tpu as pltpu


def _round_up(x, m):
    return ((x + m - 1) // m) * m


def _tpu_vmem_capacity_bytes():
    """Physical VMEM capacity; conservative fallback if the query fails."""
    try:
        info = pltpu.get_tpu_info()
        cap = int(getattr(info, "vmem_capacity_bytes", 0))
        if cap > 0:
            return cap
    except Exception:
        pass
    return 128 * 1024 * 1024  # v5e/v6e size


def _default_tiles(itemsize, vmem_cap):
    """Generation/dtype-aware default (tm, tn, tk)."""
    big_vmem = vmem_cap >= 96 * 1024 * 1024  # v5e/v6e (128 MiB) vs v7x (64 MiB)
    if itemsize <= 2:          # bf16 / fp8 inputs
        return (1024, 2048, 2048) if big_vmem else (512, 1024, 1024)
    else:                      # f32 inputs (double the bytes per element)
        return (512, 1024, 1024) if big_vmem else (256, 512, 1024)


# ---------------------------------------------------------------------------
# Kernels
# ---------------------------------------------------------------------------

def _mm_kernel(precision, x_ref, wt_ref, o_ref, acc_ref):
    # x_ref: (tm, tk), wt_ref: (tk, tn), o_ref: (tm, tn), acc_ref: (tm, tn) f32
    k = pl.program_id(2)

    @pl.when(k == 0)
    def _():
        acc_ref[...] = jnp.zeros_like(acc_ref)

    acc_ref[...] += jnp.dot(x_ref[...], wt_ref[...],
                            preferred_element_type=jnp.float32,
                            precision=precision)

    @pl.when(k == pl.num_programs(2) - 1)
    def _():
        o_ref[...] = acc_ref[...].astype(o_ref.dtype)


def _mm_bias_kernel(precision, x_ref, wt_ref, b_ref, o_ref, acc_ref):
    k = pl.program_id(2)

    @pl.when(k == 0)
    def _():
        acc_ref[...] = jnp.zeros_like(acc_ref)

    acc_ref[...] += jnp.dot(x_ref[...], wt_ref[...],
                            preferred_element_type=jnp.float32,
                            precision=precision)

    @pl.when(k == pl.num_programs(2) - 1)
    def _():
        o_ref[...] = (acc_ref[...]
                      + b_ref[...].astype(jnp.float32)).astype(o_ref.dtype)


def _mm_kernel_1k(precision, x_ref, wt_ref, o_ref):
    # Single-K-step fast path: no accumulator scratch needed.
    o_ref[...] = jnp.dot(x_ref[...], wt_ref[...],
                         preferred_element_type=jnp.float32,
                         precision=precision).astype(o_ref.dtype)


def _mm_bias_kernel_1k(precision, x_ref, wt_ref, b_ref, o_ref):
    acc = jnp.dot(x_ref[...], wt_ref[...],
                  preferred_element_type=jnp.float32, precision=precision)
    o_ref[...] = (acc + b_ref[...].astype(jnp.float32)).astype(o_ref.dtype)


# ---------------------------------------------------------------------------
# Weight preparation (hoist transpose + pad out of the per-call hot path)
# ---------------------------------------------------------------------------

class PreparedWeight(NamedTuple):
    wt: jax.Array        # (k_pad, n_pad) == weight.T zero-padded
    out_features: int
    in_features: int
    tn: int
    tk: int


def prepare_column_parallel_weight(weight, *, tn: Optional[int] = None,
                                   tk: Optional[int] = None) -> PreparedWeight:
    """Transpose + pad W once (at module init) so every forward call streams
    the (K, N) weight tiles directly (lane-dense RHS, no per-call transpose)."""
    out_features, in_features = weight.shape
    cap = _tpu_vmem_capacity_bytes()
    _, dtn, dtk = _default_tiles(jnp.dtype(weight.dtype).itemsize, cap)
    tn = tn or dtn
    tk = tk or dtk
    tn_ = min(tn, _round_up(out_features, 128))
    tk_ = min(tk, _round_up(in_features, 128))
    n_pad = _round_up(out_features, tn_)
    k_pad = _round_up(in_features, tk_)
    wt_p = jnp.pad(weight.T,
                   ((0, k_pad - in_features), (0, n_pad - out_features)))
    return PreparedWeight(wt_p, out_features, in_features, tn_, tk_)


# ---------------------------------------------------------------------------
# Forward
# ---------------------------------------------------------------------------

def column_parallel_linear(x,
                           weight: Union[jax.Array, PreparedWeight],
                           bias=None,
                           gather_input: bool = False,
                           gather_output: bool = False,
                           *, tm: Optional[int] = None,
                           tn: Optional[int] = None,
                           tk: Optional[int] = None,
                           precision=None):
    """x: [..., in_features]; weight: (out_features, in_features) or
    PreparedWeight; bias: (out_features,) or None.

    world_size == 1: gather_input / gather_output are identities.
    """
    del gather_input, gather_output  # identities for world_size == 1

    cap = _tpu_vmem_capacity_bytes()
    out_dtype = x.dtype
    lead_shape = x.shape[:-1]
    m = 1
    for d in lead_shape:
        m *= d

    # --- weight: use a pre-prepared (K_pad, N_pad) layout when supplied -----
    if isinstance(weight, PreparedWeight):
        out_features, in_features = weight.out_features, weight.in_features
        tn_, tk_ = weight.tn, weight.tk
        wt_p = weight.wt
        k_pad, n_pad = wt_p.shape
    else:
        out_features, in_features = weight.shape
        _, dtn, dtk = _default_tiles(jnp.dtype(weight.dtype).itemsize, cap)
        tn_ = min(tn or dtn, _round_up(out_features, 128))
        tk_ = min(tk or dtk, _round_up(in_features, 128))
        n_pad = _round_up(out_features, tn_)
        k_pad = _round_up(in_features, tk_)
        wt_p = jnp.pad(weight.T,
                       ((0, k_pad - in_features), (0, n_pad - out_features)))

    assert x.shape[-1] == in_features

    # --- activation tiling ---------------------------------------------------
    dtm, _, _ = _default_tiles(jnp.dtype(x.dtype).itemsize, cap)
    tm_ = min(tm or dtm, _round_up(m, 8))
    m_pad = _round_up(m, tm_)

    x2d = x.reshape(m, in_features)
    x_p = jnp.pad(x2d, ((0, m_pad - m), (0, k_pad - in_features)))

    single_k = (k_pad == tk_)
    gi, gj, gk = m_pad // tm_, n_pad // tn_, k_pad // tk_

    xb = x_p.dtype.itemsize
    wb = wt_p.dtype.itemsize
    ob = jnp.dtype(out_dtype).itemsize

    # --- VMEM budget: real double-buffered working set + headroom, with
    # per-generation ceiling (no hard 32 MiB cap). -----------------------------
    vmem_need = (2 * tm_ * tk_ * xb          # X tiles (double-buffered)
                 + 2 * tk_ * tn_ * wb        # W tiles (double-buffered)
                 + 2 * tm_ * tn_ * ob        # output tiles (double-buffered)
                 + (0 if single_k else tm_ * tn_ * 4)   # f32 accumulator
                 + (2 * tn_ * 4 if bias is not None else 0))
    ceiling = 100 * 2**20 if cap >= 96 * 2**20 else 48 * 2**20
    vmem_limit = int(min(max(int(vmem_need * 1.35) + (2 << 20), 16 * 2**20),
                         ceiling))

    # --- cost estimate: actual streamed HBM traffic ---------------------------
    flops = 2 * m_pad * n_pad * k_pad
    x_stream = m_pad * k_pad * xb * gj        # X re-read per N tile
    w_stream = k_pad * n_pad * wb * gi        # W re-read per M tile
    b_stream = (n_pad * 4 * gi) if bias is not None else 0
    out_bytes = m_pad * n_pad * ob
    cost = pl.CostEstimate(flops=flops, transcendentals=0,
                           bytes_accessed=x_stream + w_stream + b_stream + out_bytes)

    b_p = None
    if bias is not None:
        b_p = jnp.pad(bias.astype(jnp.float32),
                      (0, n_pad - out_features)).reshape(1, n_pad)

    if single_k:
        # ---- fast path: K fits in one tile; no accumulator, 2-D grid --------
        grid = (gi, gj)
        compiler_params = pltpu.CompilerParams(
            dimension_semantics=("parallel", "parallel"),
            vmem_limit_bytes=vmem_limit)
        x_spec = pl.BlockSpec((tm_, tk_), lambda i, j: (i, 0))
        w_spec = pl.BlockSpec((tk_, tn_), lambda i, j: (0, j))
        o_spec = pl.BlockSpec((tm_, tn_), lambda i, j: (i, j))
        if bias is not None:
            kernel = functools.partial(_mm_bias_kernel_1k, precision)
            in_specs = [x_spec, w_spec,
                        pl.BlockSpec((1, tn_), lambda i, j: (0, j))]
            args = (x_p, wt_p, b_p)
        else:
            kernel = functools.partial(_mm_kernel_1k, precision)
            in_specs = [x_spec, w_spec]
            args = (x_p, wt_p)
        out_p = pl.pallas_call(
            kernel,
            out_shape=jax.ShapeDtypeStruct((m_pad, n_pad), out_dtype),
            grid_spec=pltpu.PrefetchScalarGridSpec(
                num_scalar_prefetch=0, grid=grid,
                in_specs=in_specs, out_specs=o_spec, scratch_shapes=[]),
            compiler_params=compiler_params,
            cost_estimate=cost,
        )(*args)
    else:
        # ---- general path: K-innermost, output-resident f32 accumulator -----
        grid = (gi, gj, gk)
        compiler_params = pltpu.CompilerParams(
            dimension_semantics=("parallel", "parallel", "arbitrary"),
            vmem_limit_bytes=vmem_limit)
        x_spec = pl.BlockSpec((tm_, tk_), lambda i, j, k: (i, k))
        w_spec = pl.BlockSpec((tk_, tn_), lambda i, j, k: (k, j))
        o_spec = pl.BlockSpec((tm_, tn_), lambda i, j, k: (i, j))
        scratch = [pltpu.VMEM((tm_, tn_), jnp.float32)]
        if bias is not None:
            kernel = functools.partial(_mm_bias_kernel, precision)
            in_specs = [x_spec, w_spec,
                        pl.BlockSpec((1, tn_), lambda i, j, k: (0, j))]
            args = (x_p, wt_p, b_p)
        else:
            kernel = functools.partial(_mm_kernel, precision)
            in_specs = [x_spec, w_spec]
            args = (x_p, wt_p)
        out_p = pl.pallas_call(
            kernel,
            out_shape=jax.ShapeDtypeStruct((m_pad, n_pad), out_dtype),
            grid_spec=pltpu.PrefetchScalarGridSpec(
                num_scalar_prefetch=0, grid=grid,
                in_specs=in_specs, out_specs=o_spec, scratch_shapes=scratch),
            compiler_params=compiler_params,
            cost_estimate=cost,
        )(*args)

    out2d = out_p[:m, :out_features]
    return out2d.reshape(*lead_shape, out_features)


if __name__ == "__main__":
    # Small shapes consistent with a Linear over a (batch, seq, hidden) input.
    batch, seq, in_features, out_features = 2, 8, 32, 64

    key = jax.random.PRNGKey(0)
    kx, kw = jax.random.split(key)
    x = jax.random.normal(kx, (batch, seq, in_features), dtype=jnp.float32)
    # Deterministic parameter init (torch.Tensor in __init__ is uninitialized;
    # bias is zeroed in the module's __init__, mirrored here).
    weight = jax.random.normal(kw, (out_features, in_features),
                               dtype=jnp.float32) * 0.02
    bias = jnp.zeros((out_features,), dtype=jnp.float32)

    ref = x @ weight.T + bias

    # Path 1: plain (out, in) weight, bias.
    out = jax.block_until_ready(column_parallel_linear(x, weight, bias))
    assert out.shape == (batch, seq, out_features)
    assert jnp.allclose(out, ref, atol=5e-3, rtol=5e-3)

    # Path 2: pre-prepared weight (transpose+pad hoisted out of the hot path).
    pw = prepare_column_parallel_weight(weight)
    out_pw = jax.block_until_ready(column_parallel_linear(x, pw, bias))
    assert jnp.allclose(out_pw, ref, atol=5e-3, rtol=5e-3)

    # Path 3: bias=False (bias-free kernel).
    out_nb = jax.block_until_ready(column_parallel_linear(x, weight, None))
    assert jnp.allclose(out_nb, x @ weight.T, atol=5e-3, rtol=5e-3)

    print("KERNEL_OK")
</pallas_src>

<mosaic_0001>
module attributes {stable_mosaic.version = 11 : i64} {
  func.func @_mm_bias_kernel_1k(%arg0: i32, %arg1: i32, %arg2: memref<16x128xf32, #tpu.memory_space<vmem>>, %arg3: memref<128x128xf32, #tpu.memory_space<vmem>>, %arg4: memref<1x128xf32, #tpu.memory_space<vmem>>, %arg5: memref<16x128xf32, #tpu.memory_space<vmem>>) attributes {dimension_semantics = [#tpu.dimension_semantics<parallel>, #tpu.dimension_semantics<parallel>], iteration_bounds = array<i64: 1, 1>, scalar_prefetch = 0 : i64, scratch_operands = 0 : i64, tpu.core_type = #tpu.core_type<tc>, window_params = [{transform_indices = @transform_0, window_bounds = array<i64: 16, 128>}, {transform_indices = @transform_1, window_bounds = array<i64: 128, 128>}, {transform_indices = @transform_2, window_bounds = array<i64: 1, 128>}, {transform_indices = @transform_3, window_bounds = array<i64: 16, 128>}]} {
    %c0 = arith.constant 0 : index
    %c0_0 = arith.constant 0 : index
    %0 = vector.load %arg2[%c0, %c0_0] : memref<16x128xf32, #tpu.memory_space<vmem>>, vector<16x128xf32>
    %c0_1 = arith.constant 0 : index
    %c0_2 = arith.constant 0 : index
    %1 = vector.load %arg3[%c0_1, %c0_2] : memref<128x128xf32, #tpu.memory_space<vmem>>, vector<128x128xf32>
    %cst = arith.constant dense<0.000000e+00> : vector<16x128xf32>
    %2 = tpu.matmul %0, %1, %cst {dimension_numbers = #tpu.dot_dimension_numbers<[1], [0], [0], [1], [0, 0, 1, 1], [], []>} : vector<16x128xf32>, vector<128x128xf32>, vector<16x128xf32> -> vector<16x128xf32>
    %c0_3 = arith.constant 0 : index
    %c0_4 = arith.constant 0 : index
    %3 = vector.load %arg4[%c0_3, %c0_4] : memref<1x128xf32, #tpu.memory_space<vmem>>, vector<1x128xf32>
    %4 = vector.broadcast %3 : vector<1x128xf32> to vector<16x128xf32>
    %5 = arith.addf %2, %4 : vector<16x128xf32>
    %c0_5 = arith.constant 0 : index
    %c0_6 = arith.constant 0 : index
    %6 = vector.load %arg5[%c0_5, %c0_6] : memref<16x128xf32, #tpu.memory_space<vmem>>, vector<16x128xf32>
    tpu.vector_store %arg5[%c0_5, %c0_6], %5 {strides = array<i32>} : memref<16x128xf32, #tpu.memory_space<vmem>>, vector<16x128xf32>,
    return
  }
  func.func @transform_0(%arg0: i32, %arg1: i32) -> (i32, i32) {
    %c0_i32 = arith.constant 0 : i32
    %c0_i32_0 = arith.constant 0 : i32
    return %arg0, %c0_i32 : i32, i32
  }
  func.func @transform_1(%arg0: i32, %arg1: i32) -> (i32, i32) {
    %c0_i32 = arith.constant 0 : i32
    %c0_i32_0 = arith.constant 0 : i32
    return %c0_i32, %arg1 : i32, i32
  }
  func.func @transform_2(%arg0: i32, %arg1: i32) -> (i32, i32) {
    %c0_i32 = arith.constant 0 : i32
    %c0_i32_0 = arith.constant 0 : i32
    return %c0_i32, %arg1 : i32, i32
  }
  func.func @transform_3(%arg0: i32, %arg1: i32) -> (i32, i32) {
    %c0_i32 = arith.constant 0 : i32
    return %arg0, %arg1 : i32, i32
  }
}

</mosaic_0001>

<llo_original>
// kernel: tpu_custom_call.1
$region0: #{tpu_custom_call.1}
  #allocation0 [shape = 'u32[]', space=smem, size = 0x4, offset = 0x4, fixed_abs, tag = 'smem constant byte address 0x4 - core index']
  #allocation1 [shape = 'u32[144,128]{1,0:T(1,128)}', space=vmem, size = 0x12000, scoped, tag = 'internal scratch']
  %s0 = inlined_call_operand.hbm [shape: f32[16,128], index: 0, kind: input, shape index: {}]
  %s1 = inlined_call_operand.hbm [shape: f32[128,128], index: 1, kind: input, shape index: {}]
  %s2 = inlined_call_operand.vmem [shape: f32[1,128], index: 2, kind: input, shape index: {}]
  %s3 = inlined_call_operand.hbm [shape: f32[16,128], index: 3, kind: output, shape index: {}]
  %s4 = sld [smem:[#allocation0]]
  $region30: #{tpu_custom_call.1} parent=0
    _
  %s6 = ssub.s32 1, %s4
  %s7 = scalar_select 0, %s6, %s4
  $region1: #{tpu_custom_call.1} parent=0
    #allocation2 [shape = 'u8[8192]{0}', space=vmem, size = 0x2000, scoped, tag = 'input window, operand 0, single buffered']
    #allocation3 [shape = 's32[1]{0}', space=sflag, size = 0x4, scoped, tag = 'scoped memory for tpu_custom_call.1']
    #allocation4 [shape = 's32[1]{0}', space=sflag, size = 0x4, scoped, tag = 'scoped memory for tpu_custom_call.1']
    #allocation5 [shape = 'u8[65536]{0}', space=vmem, size = 0x10000, scoped, tag = 'input window, operand 1, single buffered']
    #allocation6 [shape = 's32[1]{0}', space=sflag, size = 0x4, scoped, tag = 'scoped memory for tpu_custom_call.1']
    #allocation7 [shape = 'u8[8192]{0}', space=vmem, size = 0x2000, scoped, tag = 'output window, operand 0, single buffered']
    %8 = vsyncpa [#allocation3], 0
    %9 = vsyncpa [#allocation6], 0
    %10 = vsyncpa [#allocation4], 0
    // Predicated region
    $region2: #{tpu_custom_call.1} parent=1 // pred_check
      _
    $region3: #{tpu_custom_call.1} parent=1 // pred_check_branch
      %12 = sbr.rel (0) target = $region5
    $region4: #{tpu_custom_call.1} parent=1 // pred_region
      %s14 = ssub.s32 256, 256
      %15 = vsyncadd [#allocation3], %s14
      %s16 = sshll.u32 [#allocation2], 4
      %s17 = int_to_ptr.vmem [resolvable:$true] %s16
      %22 = dma.hbm_to_vmem [thread:$0]  %s0, 256, %s17, [#allocation3], 128, 128, 8
    $region5: #{tpu_custom_call.1} parent=1 // pred_fallthru
      _
    // Predicated region
    $region6: #{tpu_custom_call.1} parent=1 // pred_check
      _
    $region7: #{tpu_custom_call.1} parent=1 // pred_check_branch
      %24 = sbr.rel (0) target = $region9
    $region8: #{tpu_custom_call.1} parent=1 // pred_region
      %s26 = ssub.s32 2048, 2048
      %27 = vsyncadd [#allocation6], %s26
      %s28 = sshll.u32 [#allocation5], 4
      %s29 = int_to_ptr.vmem [resolvable:$true] %s28
      %34 = dma.hbm_to_vmem [thread:$0]  %s1, 2048, %s29, [#allocation6], 128, 128, 8
    $region9: #{tpu_custom_call.1} parent=1 // pred_fallthru
      _
    // Predicated region
    $region10: #{tpu_custom_call.1} parent=1 // pred_check
      _
    $region11: #{tpu_custom_call.1} parent=1 // pred_check_branch
      %36 = sbr.rel (0) target = $region13
    $region12: #{tpu_custom_call.1} parent=1 // pred_region
      _
    $region13: #{tpu_custom_call.1} parent=1 // pred_fallthru
      _
    // Predicated region
    $region14: #{tpu_custom_call.1} parent=1 // pred_check
      _
    $region15: #{tpu_custom_call.1} parent=1 // pred_check_branch
      %38 = sbr.rel (0) target = $region17
    $region16: #{tpu_custom_call.1} parent=1 // pred_region
      %39 = dma.done [#allocation3], 256
    $region17: #{tpu_custom_call.1} parent=1 // pred_fallthru
      _
    // Predicated region
    $region18: #{tpu_custom_call.1} parent=1 // pred_check
      _
    $region19: #{tpu_custom_call.1} parent=1 // pred_check_branch
      %41 = sbr.rel (0) target = $region21
    $region20: #{tpu_custom_call.1} parent=1 // pred_region
      %42 = dma.done [#allocation6], 2048
    $region21: #{tpu_custom_call.1} parent=1 // pred_fallthru
      _
    %v43 = vld [vmem:[#allocation2] sm:$0xff]
    %v44 = vld [vmem:[#allocation2 + $0x8] sm:$0xff]
    %v45 = vld [vmem:[#allocation5] sm:$0xff]
    %v46 = vld [vmem:[#allocation5 + $0x8] sm:$0xff]
    %v47 = vld [vmem:[#allocation5 + $0x10] sm:$0xff]
    %v48 = vld [vmem:[#allocation5 + $0x18] sm:$0xff]
    %v49 = vld [vmem:[#allocation5 + $0x20] sm:$0xff]
    %v50 = vld [vmem:[#allocation5 + $0x28] sm:$0xff]
    %v51 = vld [vmem:[#allocation5 + $0x30] sm:$0xff]
    %v52 = vld [vmem:[#allocation5 + $0x38] sm:$0xff]
    %v53 = vld [vmem:[#allocation5 + $0x40] sm:$0xff]
    %v54 = vld [vmem:[#allocation5 + $0x48] sm:$0xff]
    %v55 = vld [vmem:[#allocation5 + $0x50] sm:$0xff]
    %v56 = vld [vmem:[#allocation5 + $0x58] sm:$0xff]
    %v57 = vld [vmem:[#allocation5 + $0x60] sm:$0xff]
    %v58 = vld [vmem:[#allocation5 + $0x68] sm:$0xff]
    %v59 = vld [vmem:[#allocation5 + $0x70] sm:$0xff]
    %v60 = vld [vmem:[#allocation5 + $0x78] sm:$0xff]
    %v61 = vld [vmem:[%s2] sm:$0x1]
    %v63 = vlaneseq
    %v64 = vshrl.u32 %v63, 7
    %v65 = vsub.s32 0, %v64
    %v66 = vrot.slane %v61, %v65
    %68 = vmatprep.subr.mxu0 0.0
    %69 = vmatpush1.msra.mxu0 %v45
    %70 = vmatprep.subr.mxu0 0.0
    %71 = vmatpush1.msra.mxu0 %v46
    %72 = vmatprep.subr.mxu0 0.0
    %73 = vmatpush1.msra.mxu0 %v47
    %74 = vmatprep.subr.mxu0 0.0
    %75 = vmatpush1.msra.mxu0 %v48
    %76 = vmatprep.subr.mxu0 0.0
    %77 = vmatpush1.msra.mxu0 %v49
    %78 = vmatprep.subr.mxu0 0.0
    %79 = vmatpush1.msra.mxu0 %v50
    %80 = vmatprep.subr.mxu0 0.0
    %81 = vmatpush1.msra.mxu0 %v51
    %82 = vmatprep.subr.mxu0 0.0
    %83 = vmatpush1.msra.mxu0 %v52
    %84 = vmatprep.subr.mxu0 0.0
    %85 = vmatpush1.msra.mxu0 %v53
    %86 = vmatprep.subr.mxu0 0.0
    %87 = vmatpush1.msra.mxu0 %v54
    %88 = vmatprep.subr.mxu0 0.0
    %89 = vmatpush1.msra.mxu0 %v55
    %90 = vmatprep.subr.mxu0 0.0
    %91 = vmatpush1.msra.mxu0 %v56
    %92 = vmatprep.subr.mxu0 0.0
    %93 = vmatpush1.msra.mxu0 %v57
    %94 = vmatprep.subr.mxu0 0.0
    %95 = vmatpush1.msra.mxu0 %v58
    %96 = vmatprep.subr.mxu0 0.0
    %97 = vmatpush1.msra.mxu0 %v59
    %98 = vmatprep.subr.mxu0 0.0
    %99 = vmatpush1.msra.mxu0 %v60
    %100 = vmatprep.subr.mxu0 0.0
    %101 = vmatpush1.msra.mxu0 0.0
    %102 = vmatprep.subr.mxu0 0.0
    %103 = vmatpush1.msra.mxu0 0.0
    %104 = vmatprep.subr.mxu0 0.0
    %105 = vmatpush1.msra.mxu0 0.0
    %106 = vmatprep.subr.mxu0 0.0
    %107 = vmatpush1.msra.mxu0 0.0
    %108 = vmatprep.subr.mxu0 0.0
    %109 = vmatpush1.msra.mxu0 0.0
    %110 = vmatprep.subr.mxu0 0.0
    %111 = vmatpush1.msra.mxu0 0.0
    %112 = vmatprep.subr.mxu0 0.0
    %113 = vmatpush1.msra.mxu0 0.0
    %114 = vmatprep.subr.mxu0 0.0
    %115 = vmatpush1.msra.mxu0 0.0
    %116 = vmatprep.subr.mxu0 0.0
    %117 = vmatpush1.msra.mxu0 0.0
    %118 = vmatprep.subr.mxu0 0.0
    %119 = vmatpush1.msra.mxu0 0.0
    %120 = vmatprep.subr.mxu0 0.0
    %121 = vmatpush1.msra.mxu0 0.0
    %122 = vmatprep.subr.mxu0 0.0
    %123 = vmatpush1.msra.mxu0 0.0
    %124 = vmatprep.subr.mxu0 0.0
    %125 = vmatpush1.msra.mxu0 0.0
    %126 = vmatprep.subr.mxu0 0.0
    %127 = vmatpush1.msra.mxu0 0.0
    %128 = vmatprep.subr.mxu0 0.0
    %129 = vmatpush1.msra.mxu0 0.0
    %130 = vmatprep.subr.mxu0 0.0
    %131 = vmatpush1.msra.mxu0 0.0
    %132 = vmatprep.mubr.f32.mxu0 0.0
    %133 = vmatmul.mubr.f32.gmra.mrb[0].mxu0 %v43
    %v134 = vpop.f32.mrb[0].mxu0
    %v135 = vadd.f32 %v66, %v134
    %v136 = vpop.f32.mrb[0].mxu0
    %137 = vmatprep.mubr.f32.mxu0 0.0
    %138 = vmatmul.mubr.f32.gmra.mrb[0].mxu0 %v44
    %v139 = vpop.f32.mrb[0].mxu0
    %v140 = vadd.f32 %v66, %v139
    %v141 = vpop.f32.mrb[0].mxu0
    %142 = vdwg.mxu0
    %143 = vst [vmem:[#allocation7] sm:$0xff] %v135
    %144 = vst [vmem:[#allocation7 + $0x8] sm:$0xff] %v140
    // Predicated region
    $region22: #{tpu_custom_call.1} parent=1 // pred_check
      _
    $region23: #{tpu_custom_call.1} parent=1 // pred_check_branch
      %146 = sbr.rel (0) target = $region25
    $region24: #{tpu_custom_call.1} parent=1 // pred_region
      %s148 = ssub.s32 256, 256
      %149 = vsyncadd [#allocation4], %s148
      %s150 = sshll.u32 [#allocation7], 4
      %s151 = int_to_ptr.vmem [resolvable:$true] %s150
      %156 = dma.vmem_to_hbm [thread:$0]  %s151, 256, %s3, [#allocation4], 128, 128, 8
    $region25: #{tpu_custom_call.1} parent=1 // pred_fallthru
      _
    // Predicated region
    $region26: #{tpu_custom_call.1} parent=1 // pred_check
      _
    $region27: #{tpu_custom_call.1} parent=1 // pred_check_branch
      %158 = sbr.rel (0) target = $region29
    $region28: #{tpu_custom_call.1} parent=1 // pred_region
      %159 = dma.done [#allocation4], 256
    $region29: #{tpu_custom_call.1} parent=1 // pred_fallthru
      _
    %160 = vsyncpa [#allocation3], 1
    %161 = vsyncpa [#allocation6], 1
    %162 = vsyncpa [#allocation4], 1

</llo_original>
